<compile_context>
chip_gen: v5e
topology: v5e:2x2
jax: 0.10.0
libtpu: 0.0.40
codegen_flags: <defaults>
</compile_context>

<pallas_src>
import jax
import jax.numpy as jnp
from jax.experimental import pallas as pl
from jax.experimental.pallas import tpu as pltpu

LANES = 128          # lane width of the padded output / weight slab
SLAB_ROWS = 40       # 4 (W1) + 4 (W2) + 8 (W3) + 16 (Wo) + 4 bias rows, padded to 8-multiple


def _round_up(x, m):
    return ((x + m - 1) // m) * m


# ---------------------------------------------------------------------------
# Kernel
# ---------------------------------------------------------------------------
def iris_mlp_kernel(x_ref, p_ref, out_ref):
    # x_ref:   (TB, 4)   f32 batch tile
    # p_ref:   (40, 128) f32 packed parameter slab (constant across grid steps)
    # out_ref: (TB, 128) f32 lane-dense output slab (only cols 0:3 are meaningful)
    x = x_ref[...]                     # (TB, 4)

    w1 = p_ref[0:4, 0:4]               # (4, 4)
    w2 = p_ref[4:8, 0:8]               # (4, 8)
    w3 = p_ref[8:16, 0:16]             # (8, 16)
    wo = p_ref[16:32, :]               # (16, 128)  zero-padded beyond col 3
    b1 = p_ref[32:33, 0:4]             # (1, 4)
    b2 = p_ref[33:34, 0:8]             # (1, 8)
    b3 = p_ref[34:35, 0:16]            # (1, 16)
    bo = p_ref[35:36, :]               # (1, 128)   zero-padded beyond col 3

    h = jnp.maximum(jnp.dot(x, w1, preferred_element_type=jnp.float32) + b1, 0.0)
    h = jnp.maximum(jnp.dot(h, w2, preferred_element_type=jnp.float32) + b2, 0.0)
    h = jnp.maximum(jnp.dot(h, w3, preferred_element_type=jnp.float32) + b3, 0.0)
    y = jnp.dot(h, wo, preferred_element_type=jnp.float32) + bo     # (TB, 128) lane-dense
    out_ref[...] = y.astype(out_ref.dtype)


# ---------------------------------------------------------------------------
# Parameter packing: 8 small arrays -> one (40, 128) VMEM-friendly slab
# ---------------------------------------------------------------------------
def pack_params(params):
    (w1, b1, w2, b2, w3, b3, wo, bo) = params
    slab = jnp.zeros((SLAB_ROWS, LANES), jnp.float32)
    slab = slab.at[0:4, 0:4].set(w1)
    slab = slab.at[4:8, 0:8].set(w2)
    slab = slab.at[8:16, 0:16].set(w3)
    slab = slab.at[16:32, 0:3].set(wo)
    slab = slab.at[32, 0:4].set(b1.reshape(-1))
    slab = slab.at[33, 0:8].set(b2.reshape(-1))
    slab = slab.at[34, 0:16].set(b3.reshape(-1))
    slab = slab.at[35, 0:3].set(bo.reshape(-1))
    return slab


# ---------------------------------------------------------------------------
# Wrapper
# ---------------------------------------------------------------------------
def iris_forward(x, packed_params, *, block_batch=1024, out_features=3):
    batch, in_features = x.shape

    # Batch tile: large (pipelined, MXU-friendly cadence), multiple of 8,
    # capped so tiny batches still get a single exact block.
    tb = min(block_batch, _round_up(batch, 8))
    padded_batch = _round_up(batch, tb)
    if padded_batch != batch:
        x = jnp.pad(x, ((0, padded_batch - batch), (0, 0)))

    grid = (padded_batch // tb,)

    out = pl.pallas_call(
        iris_mlp_kernel,
        out_shape=jax.ShapeDtypeStruct((padded_batch, LANES), jnp.float32),
        grid=grid,
        in_specs=[
            pl.BlockSpec((tb, in_features), lambda i: (i, 0)),      # batch tile
            pl.BlockSpec((SLAB_ROWS, LANES), lambda i: (0, 0)),     # params: VMEM-resident
        ],
        out_specs=pl.BlockSpec((tb, LANES), lambda i: (i, 0)),      # lane-dense output slab
        compiler_params=pltpu.CompilerParams(
            dimension_semantics=("parallel",),                      # shard batch across TCs (v7x)
            vmem_limit_bytes=64 * 1024 * 1024,                      # safe on v5e/v6e/v7x
        ),
    )(x, packed_params)

    return out[:batch, :out_features]


# ---------------------------------------------------------------------------
# Init + pure-JAX reference
# ---------------------------------------------------------------------------
def init_params(key, in_features=4, h1=4, h2=8, h3=16, out_features=3):
    # Deterministic synthetic init (uniform, PyTorch-Linear-style bound 1/sqrt(fan_in)).
    def linear(key, fan_in, fan_out):
        kw, kb = jax.random.split(key)
        bound = 1.0 / jnp.sqrt(fan_in)
        w = jax.random.uniform(kw, (fan_in, fan_out), jnp.float32, -bound, bound)
        b = jax.random.uniform(kb, (1, fan_out), jnp.float32, -bound, bound)
        return w, b

    k1, k2, k3, k4 = jax.random.split(key, 4)
    w1, b1 = linear(k1, in_features, h1)
    w2, b2 = linear(k2, h1, h2)
    w3, b3 = linear(k3, h2, h3)
    wo, bo = linear(k4, h3, out_features)
    return (w1, b1, w2, b2, w3, b3, wo, bo)


def reference_forward(x, params):
    (w1, b1, w2, b2, w3, b3, wo, bo) = params
    h = jax.nn.relu(x @ w1 + b1)
    h = jax.nn.relu(h @ w2 + b2)
    h = jax.nn.relu(h @ w3 + b3)
    return h @ wo + bo


if __name__ == "__main__":
    key = jax.random.PRNGKey(0)
    kx, kp = jax.random.split(key)

    # Small deterministic test: non-multiple batch exercises padding, and
    # block_batch=32 forces a multi-step (pipelined, parallel) grid.
    batch, in_features = 100, 4
    x = jax.random.normal(kx, (batch, in_features), jnp.float32)
    params = init_params(kp)
    packed = pack_params(params)

    out = iris_forward(x, packed, block_batch=32)
    out = jax.block_until_ready(out)

    ref = reference_forward(x, params)
    assert out.shape == (batch, 3)
    assert jnp.allclose(out, ref, atol=1e-5, rtol=1e-5)

    print("KERNEL_OK")
</pallas_src>

<mosaic_0001>
module attributes {stable_mosaic.version = 11 : i64} {
  func.func @iris_mlp_kernel(%arg0: i32, %arg1: memref<32x4xf32, #tpu.memory_space<vmem>>, %arg2: memref<40x128xf32, #tpu.memory_space<vmem>>, %arg3: memref<32x128xf32, #tpu.memory_space<vmem>>) attributes {dimension_semantics = [#tpu.dimension_semantics<parallel>], iteration_bounds = array<i64: 4>, scalar_prefetch = 0 : i64, scratch_operands = 0 : i64, tpu.core_type = #tpu.core_type<tc>, window_params = [{transform_indices = @transform_0, window_bounds = array<i64: 32, 4>}, {pipeline_mode = #tpu.pipeline_mode<synchronous>, transform_indices = @transform_1, window_bounds = array<i64: 40, 128>}, {transform_indices = @transform_2, window_bounds = array<i64: 32, 128>}]} {
    %c0 = arith.constant 0 : index
    %c0_0 = arith.constant 0 : index
    %0 = vector.load %arg1[%c0, %c0_0] : memref<32x4xf32, #tpu.memory_space<vmem>>, vector<32x4xf32>
    %c0_1 = arith.constant 0 : index
    %c0_2 = arith.constant 0 : index
    %1 = vector.load %arg2[%c0_1, %c0_2] : memref<40x128xf32, #tpu.memory_space<vmem>>, vector<4x4xf32>
    %c4 = arith.constant 4 : index
    %c0_3 = arith.constant 0 : index
    %2 = vector.load %arg2[%c4, %c0_3] : memref<40x128xf32, #tpu.memory_space<vmem>>, vector<4x8xf32>
    %c8 = arith.constant 8 : index
    %c0_4 = arith.constant 0 : index
    %3 = vector.load %arg2[%c8, %c0_4] : memref<40x128xf32, #tpu.memory_space<vmem>>, vector<8x16xf32>
    %c16 = arith.constant 16 : index
    %c0_5 = arith.constant 0 : index
    %4 = vector.load %arg2[%c16, %c0_5] : memref<40x128xf32, #tpu.memory_space<vmem>>, vector<16x128xf32>
    %c32 = arith.constant 32 : index
    %c0_6 = arith.constant 0 : index
    %5 = vector.load %arg2[%c32, %c0_6] : memref<40x128xf32, #tpu.memory_space<vmem>>, vector<1x4xf32>
    %c33 = arith.constant 33 : index
    %c0_7 = arith.constant 0 : index
    %6 = vector.load %arg2[%c33, %c0_7] : memref<40x128xf32, #tpu.memory_space<vmem>>, vector<1x8xf32>
    %c34 = arith.constant 34 : index
    %c0_8 = arith.constant 0 : index
    %7 = vector.load %arg2[%c34, %c0_8] : memref<40x128xf32, #tpu.memory_space<vmem>>, vector<1x16xf32>
    %c35 = arith.constant 35 : index
    %c0_9 = arith.constant 0 : index
    %8 = vector.load %arg2[%c35, %c0_9] : memref<40x128xf32, #tpu.memory_space<vmem>>, vector<1x128xf32>
    %cst = arith.constant dense<0.000000e+00> : vector<32x4xf32>
    %9 = tpu.matmul %0, %1, %cst {dimension_numbers = #tpu.dot_dimension_numbers<[1], [0], [0], [1], [0, 0, 1, 1], [], []>} : vector<32x4xf32>, vector<4x4xf32>, vector<32x4xf32> -> vector<32x4xf32>
    %10 = vector.broadcast %5 : vector<1x4xf32> to vector<32x4xf32>
    %11 = arith.addf %9, %10 : vector<32x4xf32>
    %cst_10 = arith.constant 0.000000e+00 : f32
    %12 = vector.broadcast %cst_10 : f32 to vector<32x4xf32>
    %13 = arith.maximumf %11, %12 : vector<32x4xf32>
    %cst_11 = arith.constant dense<0.000000e+00> : vector<32x8xf32>
    %14 = tpu.matmul %13, %2, %cst_11 {dimension_numbers = #tpu.dot_dimension_numbers<[1], [0], [0], [1], [0, 0, 1, 1], [], []>} : vector<32x4xf32>, vector<4x8xf32>, vector<32x8xf32> -> vector<32x8xf32>
    %15 = vector.broadcast %6 : vector<1x8xf32> to vector<32x8xf32>
    %16 = arith.addf %14, %15 : vector<32x8xf32>
    %cst_12 = arith.constant 0.000000e+00 : f32
    %17 = vector.broadcast %cst_12 : f32 to vector<32x8xf32>
    %18 = arith.maximumf %16, %17 : vector<32x8xf32>
    %cst_13 = arith.constant dense<0.000000e+00> : vector<32x16xf32>
    %19 = tpu.matmul %18, %3, %cst_13 {dimension_numbers = #tpu.dot_dimension_numbers<[1], [0], [0], [1], [0, 0, 1, 1], [], []>} : vector<32x8xf32>, vector<8x16xf32>, vector<32x16xf32> -> vector<32x16xf32>
    %20 = vector.broadcast %7 : vector<1x16xf32> to vector<32x16xf32>
    %21 = arith.addf %19, %20 : vector<32x16xf32>
    %cst_14 = arith.constant 0.000000e+00 : f32
    %22 = vector.broadcast %cst_14 : f32 to vector<32x16xf32>
    %23 = arith.maximumf %21, %22 : vector<32x16xf32>
    %cst_15 = arith.constant dense<0.000000e+00> : vector<32x128xf32>
    %24 = tpu.matmul %23, %4, %cst_15 {dimension_numbers = #tpu.dot_dimension_numbers<[1], [0], [0], [1], [0, 0, 1, 1], [], []>} : vector<32x16xf32>, vector<16x128xf32>, vector<32x128xf32> -> vector<32x128xf32>
    %25 = vector.broadcast %8 : vector<1x128xf32> to vector<32x128xf32>
    %26 = arith.addf %24, %25 : vector<32x128xf32>
    %c0_16 = arith.constant 0 : index
    %c0_17 = arith.constant 0 : index
    %27 = vector.load %arg3[%c0_16, %c0_17] : memref<32x128xf32, #tpu.memory_space<vmem>>, vector<32x128xf32>
    tpu.vector_store %arg3[%c0_16, %c0_17], %26 {strides = array<i32>} : memref<32x128xf32, #tpu.memory_space<vmem>>, vector<32x128xf32>,
    return
  }
  func.func @transform_0(%arg0: i32) -> (i32, i32) {
    %c0_i32 = arith.constant 0 : i32
    %c0_i32_0 = arith.constant 0 : i32
    return %arg0, %c0_i32 : i32, i32
  }
  func.func @transform_1(%arg0: i32) -> (i32, i32) {
    %c0_i32 = arith.constant 0 : i32
    %c0_i32_0 = arith.constant 0 : i32
    %c0_i32_1 = arith.constant 0 : i32
    return %c0_i32, %c0_i32_0 : i32, i32
  }
  func.func @transform_2(%arg0: i32) -> (i32, i32) {
    %c0_i32 = arith.constant 0 : i32
    %c0_i32_0 = arith.constant 0 : i32
    return %arg0, %c0_i32 : i32, i32
  }
}

</mosaic_0001>

<llo_original>
// kernel: tpu_custom_call.1
$region0: #{tpu_custom_call.1}
  #allocation0 [shape = 'u32[]', space=smem, size = 0x4, offset = 0x4, fixed_abs, tag = 'smem constant byte address 0x4 - core index']
  #allocation1 [shape = 'u32[72,128]{1,0:T(1,128)}', space=vmem, size = 0x9000, scoped, tag = 'internal scratch']
  %s0 = inlined_call_operand.vmem [shape: f32[128,4], index: 0, kind: input, shape index: {}]
  %s1 = inlined_call_operand.vmem [shape: f32[40,128], index: 1, kind: input, shape index: {}]
  %s2 = inlined_call_operand.hbm [shape: f32[128,128], index: 2, kind: output, shape index: {}]
  %s3 = sld [smem:[#allocation0]]
  $region41: #{tpu_custom_call.1} parent=0
    _
  %s5 = ssub.s32 1, %s3
  %s6 = scalar_select 0, %s5, %s3
  $region1: #{tpu_custom_call.1} parent=0
    #allocation2 [shape = 'u8[32768]{0}', space=vmem, size = 0x8000, scoped, tag = 'output window, operand 0']
    #allocation3 [shape = 's32[2]{0}', space=sflag, size = 0x8, scoped, tag = 'scoped memory for tpu_custom_call.1']
    %7 = vsyncpa [#allocation3], 0
    %s8 = scalar_lea.sflag [#allocation3], 1
    %9 = vsyncpa %s8, 0
    loop: start=0, step=1, limit=6
    $region2: #{tpu_custom_call.1} parent=1 // loop_pre_header
      _
    $region3: #{tpu_custom_call.1} parent=1 // loop_header
      %s11 = sphi 0, %s15
      %p12 = scmp.ge.s32.totalorder %s11, 6
      %s21 = sphi 0, %s23
      %s24 = sphi 0, %s21
      %s25 = sphi 0, %s24
      %s41 = sphi 0, %s25
      %s45 = sphi 0, %s45
      %s47 = sphi 0, %s45
      %s48 = sphi 0, %s47
      %s62 = sphi 0, %s48
      %s68 = sphi 0, %s70
      %s71 = sphi 0, %s68
      %s72 = sphi 0, %s71
      %s88 = sphi 0, %s72
    $region4: #{tpu_custom_call.1} parent=1 // loop_header_branch
      %14 = sbr.rel (%p12) target = $region8
    $region5: #{tpu_custom_call.1} parent=1 // loop_body
      %s16 = ssub.s32 %s11, 1
      %s17 = ssub.s32 %s11, 2
      %s18 = sadd.s32 %s11, 1
      %s19 = ssub.s32 %s11, %s18
      %p20 = scmp.eq.s32.totalorder %s19, 0
      %s22 = sadd.s32 %s21, 1
      %s23 = scalar_select %p20, %s21, %s22
      %p26 = pneg %p20
      %p27 = scmp.eq.s32.totalorder %s11, 3
      %p28 = por %p26, %p27
      %p29 = scmp.ne.s32.totalorder %s21, %s24
      %p30 = scmp.eq.s32.totalorder %s11, 0
      %p31 = por %p29, %p30
      %p32 = scmp.ne.s32.totalorder %s21, %s24
      %p33 = scmp.eq.s32.totalorder %s16, 3
      %p34 = por %p32, %p33
      %p35 = scmp.ne.s32.totalorder %s24, %s25
      %p36 = scmp.eq.s32.totalorder %s16, 0
      %p37 = por %p35, %p36
      %p38 = scmp.ne.s32.totalorder %s24, %s25
      %p39 = scmp.eq.s32.totalorder %s17, 3
      %p40 = por %p38, %p39
      %p42 = scmp.ne.s32.totalorder %s25, %s41
      %p43 = scmp.eq.s32.totalorder %s17, 0
      %p44 = por %p42, %p43
      %s46 = sadd.s32 %s45, 1
      %p49 = scmp.eq.s32.totalorder %s11, 3
      %p50 = scmp.ne.s32.totalorder %s45, %s47
      %p51 = scmp.eq.s32.totalorder %s11, 0
      %p52 = por %p50, %p51
      %p53 = scmp.ne.s32.totalorder %s45, %s47
      %p54 = scmp.eq.s32.totalorder %s16, 3
      %p55 = por %p53, %p54
      %p56 = scmp.ne.s32.totalorder %s47, %s48
      %p57 = scmp.eq.s32.totalorder %s16, 0
      %p58 = por %p56, %p57
      %p59 = scmp.ne.s32.totalorder %s47, %s48
      %p60 = scmp.eq.s32.totalorder %s17, 3
      %p61 = por %p59, %p60
      %p63 = scmp.ne.s32.totalorder %s48, %s62
      %p64 = scmp.eq.s32.totalorder %s17, 0
      %p65 = por %p63, %p64
      %s66 = ssub.s32 %s11, %s18
      %p67 = scmp.eq.s32.totalorder %s66, 0
      %s69 = sadd.s32 %s68, 1
      %s70 = scalar_select %p67, %s68, %s69
      %p73 = pneg %p67
      %p74 = scmp.eq.s32.totalorder %s11, 3
      %p75 = por %p73, %p74
      %p76 = scmp.ne.s32.totalorder %s68, %s71
      %p77 = scmp.eq.s32.totalorder %s11, 0
      %p78 = por %p76, %p77
      %p79 = scmp.ne.s32.totalorder %s68, %s71
      %p80 = scmp.eq.s32.totalorder %s16, 3
      %p81 = por %p79, %p80
      %p82 = scmp.ne.s32.totalorder %s71, %s72
      %p83 = scmp.eq.s32.totalorder %s16, 0
      %p84 = por %p82, %p83
      %p85 = scmp.ne.s32.totalorder %s71, %s72
      %p86 = scmp.eq.s32.totalorder %s17, 3
      %p87 = por %p85, %p86
      %p89 = scmp.ne.s32.totalorder %s72, %s88
      %p90 = scmp.eq.s32.totalorder %s17, 0
      %p91 = por %p89, %p90
      %p92 = scmp.le.s32.totalorder 1, %s11
      %p93 = scmp.lt.s32.totalorder %s11, 5
      %p94 = pnand %p92, %p93
      %p95 = pneg %p94
      // Predicated region
      $region9: #{tpu_custom_call.1} parent=5 // pred_check
        _
      $region10: #{tpu_custom_call.1} parent=5 // pred_check_branch
        %97 = sbr.rel (%p94) target = $region12
      $region11: #{tpu_custom_call.1} parent=5 // pred_region
        %s98 = ssub.s32 %s11, 1
        // Predicated region
        $region13: #{tpu_custom_call.1} parent=11 // pred_check
          %p99 = pneg %p58
        $region14: #{tpu_custom_call.1} parent=11 // pred_check_branch
          %101 = sbr.rel (%p99) target = $region16
        $region15: #{tpu_custom_call.1} parent=11 // pred_region
          _
        $region16: #{tpu_custom_call.1} parent=11 // pred_fallthru
          _
      $region12: #{tpu_custom_call.1} parent=5 // pred_fallthru
        _
      %p102 = scmp.lt.s32.totalorder %s11, 4
      // Predicated region
      $region17: #{tpu_custom_call.1} parent=5 // pred_check
        %p103 = pneg %p102
      $region18: #{tpu_custom_call.1} parent=5 // pred_check_branch
        %105 = sbr.rel (%p103) target = $region20
      $region19: #{tpu_custom_call.1} parent=5 // pred_region
        // Predicated region
        $region21: #{tpu_custom_call.1} parent=19 // pred_check
          %p106 = pneg %p31
        $region22: #{tpu_custom_call.1} parent=19 // pred_check_branch
          %108 = sbr.rel (%p106) target = $region24
        $region23: #{tpu_custom_call.1} parent=19 // pred_region
          %s109 = smul.u32 4, %s11
          %p110 = scmp.lt.s32.totalorder %s109, 15
          %s111 = scalar_select %p110, %s109, 15
          %s112 = smul.addr %s111, 8
          %s113 = scalar_lea.vmem %s0, %s112
          %s114 = smul.u32 4, %s11
        $region24: #{tpu_custom_call.1} parent=19 // pred_fallthru
          _
      $region20: #{tpu_custom_call.1} parent=5 // pred_fallthru
        _
      %p115 = scmp.le.s32.totalorder 1, %s11
      %p116 = scmp.lt.s32.totalorder %s11, 5
      %p117 = pnand %p115, %p116
      %p118 = pneg %p117
      // Predicated region
      $region25: #{tpu_custom_call.1} parent=5 // pred_check
        _
      $region26: #{tpu_custom_call.1} parent=5 // pred_check_branch
        %120 = sbr.rel (%p117) target = $region28
      $region27: #{tpu_custom_call.1} parent=5 // pred_region
        %s121 = ssub.s32 %s11, 1
        %s122 = smul.u32 4, %s16
        %p123 = scmp.lt.s32.totalorder %s122, 15
        %s124 = scalar_select %p123, %s122, 15
        %s125 = smul.addr %s124, 8
        %s126 = scalar_lea.vmem %s0, %s125
        %p127 = pneg %p37
        %p128 = pneg %p34
        %p129 = pneg %p58
        %p130 = pneg %p55
        %p131 = pneg %p84
        %p132 = pneg %p81
        %s133 = sand.u32 %s71, 1
        %s134 = scalar_lea.sflag [#allocation3], %s133
        %s135 = sand.u32 %s71, 1
        %s136 = smul.addr %s135, 32
        %s137 = scalar_lea.vmem [#allocation2], %s136
        %s138 = smul.u32 4, %s16
        %p139 = scmp.lt.s32.totalorder %s138, 15
        %s140 = scalar_select %p139, %s138, 15
        %s141 = smul.addr %s140, 8
        %s142 = scalar_lea.vmem %s0, %s141
        %s143 = smul.u32 4, %s16
        %s144 = smul.u32 4, %s16
        %v145 = vld [vmem:[%s142] sm:$0xff]
        %v146 = vld [vmem:[%s142 + $0x8] sm:$0xff]
        %v147 = vld [vmem:[%s142 + $0x10] sm:$0xff]
        %v148 = vld [vmem:[%s142 + $0x18] sm:$0xff]
        %v149 = vld [vmem:[%s1] sm:$0xf]
        %v150 = vld [vmem:[%s1 + $0x4] sm:$0xf]
        %v151 = vld [vmem:[%s1 + $0x8] sm:$0xff]
        %v152 = vld [vmem:[%s1 + $0x10] sm:$0xff]
        %v153 = vld [vmem:[%s1 + $0x18] sm:$0xff]
        %v154 = vld [vmem:[%s1 + $0x20] sm:$0x1]
        %v155 = vld [vmem:[%s1 + $0x21] sm:$0x1]
        %v156 = vld [vmem:[%s1 + $0x22] sm:$0x1]
        %v157 = vld [vmem:[%s1 + $0x23] sm:$0x1]
        %v158 = vperm.slane %v154, 0
        %vm159 = vcmask 31744
        %v161 = vsel %vm159, %v145, 0
        %v164 = vsel %vm159, %v146, 0
        %v167 = vsel %vm159, %v147, 0
        %v170 = vsel %vm159, %v148, 0
        %vm172 = vcmask 1043456
        %v174 = vsel %vm172, %v149, 0
        %176 = vmatpush.msra.mxu0 0.0
        %177 = vmatpush.msra.mxu0 0.0
        %178 = vmatpush.msra.mxu0 0.0
        %179 = vmatpush.msra.mxu0 0.0
        %180 = vmatpush.msra.mxu0 0.0
        %181 = vmatpush.msra.mxu0 0.0
        %182 = vmatpush.msra.mxu0 0.0
        %183 = vmatpush.msra.mxu0 0.0
        %184 = vmatpush.msra.mxu0 0.0
        %185 = vmatpush.msra.mxu0 0.0
        %186 = vmatpush.msra.mxu0 0.0
        %187 = vmatpush.msra.mxu0 0.0
        %188 = vmatpush.msra.mxu0 0.0
        %189 = vmatpush.msra.mxu0 0.0
        %190 = vmatpush.msra.mxu0 0.0
        %191 = vmatpush.msra.mxu0 %v174
        %192 = vmatmul.f32.gmra.mxu0 %v161
        %v193 = vpop.f32.mrf.mxu0
        %v194 = vadd.f32 %v158, %v193
        %195 = vmatmul.f32.gmra.mxu0 %v164
        %v196 = vpop.f32.mrf.mxu0
        %v197 = vadd.f32 %v158, %v196
        %198 = vmatmul.f32.gmra.mxu0 %v167
        %v199 = vpop.f32.mrf.mxu0
        %v200 = vadd.f32 %v158, %v199
        %201 = vmatmul.f32.gmra.mxu0 %v170
        %v202 = vpop.f32.mrf.mxu0
        %v203 = vadd.f32 %v158, %v202
        %204 = vdwg.mxu0
        %v205 = vmax.f32 %v194, 0.0
        %v206 = vmax.f32 %v197, 0.0
        %v207 = vmax.f32 %v200, 0.0
        %v208 = vmax.f32 %v203, 0.0
        %v209 = vperm.slane %v155, 0
        %v211 = vsel %vm159, %v205, 0
        %v214 = vsel %vm159, %v206, 0
        %v217 = vsel %vm159, %v207, 0
        %v220 = vsel %vm159, %v208, 0
        %v223 = vsel %vm172, %v150, 0
        %225 = vmatpush.msra.mxu0 0.0
        %226 = vmatpush.msra.mxu0 0.0
        %227 = vmatpush.msra.mxu0 0.0
        %228 = vmatpush.msra.mxu0 0.0
        %229 = vmatpush.msra.mxu0 0.0
        %230 = vmatpush.msra.mxu0 0.0
        %231 = vmatpush.msra.mxu0 0.0
        %232 = vmatpush.msra.mxu0 0.0
        %233 = vmatpush.msra.mxu0 0.0
        %234 = vmatpush.msra.mxu0 0.0
        %235 = vmatpush.msra.mxu0 0.0
        %236 = vmatpush.msra.mxu0 0.0
        %237 = vmatpush.msra.mxu0 0.0
        %238 = vmatpush.msra.mxu0 0.0
        %239 = vmatpush.msra.mxu0 0.0
        %240 = vmatpush.msra.mxu0 %v223
        %241 = vmatmul.f32.gmra.mxu0 %v211
        %v242 = vpop.f32.mrf.mxu0
        %v243 = vadd.f32 %v209, %v242
        %244 = vmatmul.f32.gmra.mxu0 %v214
        %v245 = vpop.f32.mrf.mxu0
        %v246 = vadd.f32 %v209, %v245
        %247 = vmatmul.f32.gmra.mxu0 %v217
        %v248 = vpop.f32.mrf.mxu0
        %v249 = vadd.f32 %v209, %v248
        %250 = vmatmul.f32.gmra.mxu0 %v220
        %v251 = vpop.f32.mrf.mxu0
        %v252 = vadd.f32 %v209, %v251
        %253 = vdwg.mxu0
        %v254 = vmax.f32 %v243, 0.0
        %v255 = vmax.f32 %v246, 0.0
        %v256 = vmax.f32 %v249, 0.0
        %v257 = vmax.f32 %v252, 0.0
        %v258 = vperm.slane %v156, 0
        %vm259 = vcmask 64512
        %v261 = vsel %vm259, %v254, 0
        %v264 = vsel %vm259, %v255, 0
        %v267 = vsel %vm259, %v256, 0
        %v270 = vsel %vm259, %v257, 0
        %272 = vmatpush.msra.mxu0 0.0
        %273 = vmatpush.msra.mxu0 0.0
        %274 = vmatpush.msra.mxu0 0.0
        %275 = vmatpush.msra.mxu0 0.0
        %276 = vmatpush.msra.mxu0 0.0
        %277 = vmatpush.msra.mxu0 0.0
        %278 = vmatpush.msra.mxu0 0.0
        %279 = vmatpush.msra.mxu0 0.0
        %280 = vmatpush.msra.mxu0 0.0
        %281 = vmatpush.msra.mxu0 0.0
        %282 = vmatpush.msra.mxu0 0.0
        %283 = vmatpush.msra.mxu0 0.0
        %284 = vmatpush.msra.mxu0 0.0
        %285 = vmatpush.msra.mxu0 0.0
        %286 = vmatpush.msra.mxu0 0.0
        %287 = vmatpush.msra.mxu0 %v151
        %288 = vmatmul.f32.gmra.mxu0 %v261
        %v289 = vpop.f32.mrf.mxu0
        %v290 = vadd.f32 %v258, %v289
        %291 = vmatmul.f32.gmra.mxu0 %v264
        %v292 = vpop.f32.mrf.mxu0
        %v293 = vadd.f32 %v258, %v292
        %294 = vmatmul.f32.gmra.mxu0 %v267
        %v295 = vpop.f32.mrf.mxu0
        %v296 = vadd.f32 %v258, %v295
        %297 = vmatmul.f32.gmra.mxu0 %v270
        %v298 = vpop.f32.mrf.mxu0
        %v299 = vadd.f32 %v258, %v298
        %300 = vdwg.mxu0
        %v301 = vmax.f32 %v290, 0.0
        %v302 = vmax.f32 %v293, 0.0
        %v303 = vmax.f32 %v296, 0.0
        %v304 = vmax.f32 %v299, 0.0
        %v305 = vperm.slane %v157, 0
        %vm306 = vcmask 130048
        %v308 = vsel %vm306, %v301, 0
        %v311 = vsel %vm306, %v302, 0
        %v314 = vsel %vm306, %v303, 0
        %v317 = vsel %vm306, %v304, 0
        %319 = vmatpush.msra.mxu0 0.0
        %320 = vmatpush.msra.mxu0 0.0
        %321 = vmatpush.msra.mxu0 0.0
        %322 = vmatpush.msra.mxu0 0.0
        %323 = vmatpush.msra.mxu0 0.0
        %324 = vmatpush.msra.mxu0 0.0
        %325 = vmatpush.msra.mxu0 0.0
        %326 = vmatpush.msra.mxu0 0.0
        %327 = vmatpush.msra.mxu0 0.0
        %328 = vmatpush.msra.mxu0 0.0
        %329 = vmatpush.msra.mxu0 0.0
        %330 = vmatpush.msra.mxu0 0.0
        %331 = vmatpush.msra.mxu0 0.0
        %332 = vmatpush.msra.mxu0 0.0
        %333 = vmatpush.msra.mxu0 %v153
        %334 = vmatpush.msra.mxu0 %v152
        %335 = vmatmul.f32.gmra.mxu0 %v308
        %v336 = vpop.f32.mrf.mxu0
        %v337 = vadd.f32 %v305, %v336
        %338 = vmatmul.f32.gmra.mxu0 %v311
        %v339 = vpop.f32.mrf.mxu0
        %v340 = vadd.f32 %v305, %v339
        %341 = vmatmul.f32.gmra.mxu0 %v314
        %v342 = vpop.f32.mrf.mxu0
        %v343 = vadd.f32 %v305, %v342
        %344 = vmatmul.f32.gmra.mxu0 %v317
        %v345 = vpop.f32.mrf.mxu0
        %v346 = vadd.f32 %v305, %v345
        %347 = vdwg.mxu0
        %348 = vst [vmem:[%s137] sm:$0xff] %v337
        %349 = vst [vmem:[%s137 + $0x8] sm:$0xff] %v340
        %350 = vst [vmem:[%s137 + $0x10] sm:$0xff] %v343
        %351 = vst [vmem:[%s137 + $0x18] sm:$0xff] %v346
        %s352 = sand.u32 %s71, 1
        %s353 = scalar_lea.sflag [#allocation3], %s352
        %s354 = sand.u32 %s71, 1
        %s355 = smul.addr %s354, 32
        %s356 = scalar_lea.vmem [#allocation2], %s355
        // Predicated region
        $region29: #{tpu_custom_call.1} parent=27 // pred_check
          %p357 = pneg %p81
        $region30: #{tpu_custom_call.1} parent=27 // pred_check_branch
          %359 = sbr.rel (%p357) target = $region32
        $region31: #{tpu_custom_call.1} parent=27 // pred_region
          %s360 = smul.u32 4, %s16
          %362 = vsyncadd %s353, 0
          %s363 = smul.addr %s360, 8
          %s364 = scalar_lea.hbm %s2, %s363
          %s365 = sshll.u32 %s356, 4
          %s366 = int_to_ptr.vmem [resolvable:$true] %s365
          %s367 = sshll.u32 %s364, 4
          %s368 = int_to_ptr.hbm [resolvable:$true] %s367
          %373 = dma.vmem_to_hbm [thread:$0]  %s366, 512, %s368, %s353, 128, 128, 8
        $region32: #{tpu_custom_call.1} parent=27 // pred_fallthru
          _
      $region28: #{tpu_custom_call.1} parent=5 // pred_fallthru
        _
      %p374 = scmp.le.s32.totalorder 2, %s11
      // Predicated region
      $region33: #{tpu_custom_call.1} parent=5 // pred_check
        %p375 = pneg %p374
      $region34: #{tpu_custom_call.1} parent=5 // pred_check_branch
        %377 = sbr.rel (%p375) target = $region36
      $region35: #{tpu_custom_call.1} parent=5 // pred_region
        %s378 = ssub.s32 %s11, 2
        // Predicated region
        $region37: #{tpu_custom_call.1} parent=35 // pred_check
          %p379 = pneg %p87
        $region38: #{tpu_custom_call.1} parent=35 // pred_check_branch
          %381 = sbr.rel (%p379) target = $region40
        $region39: #{tpu_custom_call.1} parent=35 // pred_region
          %s382 = sand.u32 %s72, 1
          %s383 = scalar_lea.sflag [#allocation3], %s382
          %s384 = sand.u32 %s72, 1
          %s385 = smul.addr %s384, 32
          %s386 = scalar_lea.vmem [#allocation2], %s385
          %388 = dma.done %s383, 512
        $region40: #{tpu_custom_call.1} parent=35 // pred_fallthru
          _
      $region36: #{tpu_custom_call.1} parent=5 // pred_fallthru
        _
    $region6: #{tpu_custom_call.1} parent=1 // loop_footer
      %s15 = sadd.s32 1, %s11
    $region7: #{tpu_custom_call.1} parent=1 // loop_footer_branch
      %10 = sbr.rel target = $region3
    $region8: #{tpu_custom_call.1} parent=1 // loop_exit
      _
    %389 = vsyncpa [#allocation3], 1
    %s390 = scalar_lea.sflag [#allocation3], 1
    %391 = vsyncpa %s390, 1

</llo_original>
